<compile_context>
chip_gen: v7x
topology: tpu7x:2x2x1
jax: 0.10.0
libtpu: 0.0.40
codegen_flags: <defaults>
</compile_context>

<pallas_src>
import numpy as np
import jax
import jax.numpy as jnp
from jax.experimental import pallas as pl
from jax.experimental.pallas import tpu as pltpu


_SEL_BUDGET_BYTES = 4 * 1024 * 1024     # max size of a resident one-hot selector


def _nearest_src_indices(out_size: int, in_size: int) -> np.ndarray:
    # PyTorch 'nearest' (legacy, no half-pixel): src = floor(dst * in / out).
    dst = np.arange(out_size, dtype=np.int64)
    src = (dst * in_size) // out_size
    return np.minimum(src, in_size - 1)


def _divisors(n: int):
    ds = set()
    d = 1
    while d * d <= n:
        if n % d == 0:
            ds.add(d)
            ds.add(n // d)
        d += 1
    return sorted(ds)


def _round_up(x: int, m: int) -> int:
    return ((x + m - 1) // m) * m


def _vmem_budgets():
    """(vmem_limit_bytes, streamed-block budget).  Raised on 128 MiB-VMEM parts
    (v5e/v6e); conservative on v7x (64 MiB physical) or when the query fails."""
    try:
        cap = int(getattr(pltpu.get_tpu_info(), "vmem_capacity_bytes", 0) or 0)
    except Exception:
        cap = 0
    if cap >= 100 * 1024 * 1024:          # v5e / v6e: 128 MiB physical VMEM
        return 64 * 1024 * 1024, 28 * 1024 * 1024
    return 32 * 1024 * 1024, 12 * 1024 * 1024   # v7x / unknown: conservative


def _pick_tile(total: int, cap: int, align: int, min_steps: int = 4) -> int:
    """Aligned tile for a cdiv grid (ragged last block is fine).  Prefers
    >= min_steps grid steps (>= 2 per v7x TensorCore) when the problem allows."""
    total = int(total)
    if total <= align:
        return total                                    # full dim: always legal
    cap = max(align, (max(align, int(cap)) // align) * align)
    tile = min(cap, (total // align) * align)
    if total >= min_steps * align:
        per_step = _round_up(pl.cdiv(total, min_steps), align)
        tile = min(tile, max(align, per_step))
    return max(align, tile)


# ---------------------------------------------------------------------------
# Kernels
# ---------------------------------------------------------------------------

def _resize_rows_kernel(sel_ref, x_ref, o_ref):
    """Fast path: one lane-dense 2-D matmul per block of flattened input rows.

    x_ref:   (TR, G*W)        -- G input rows folded into the lane axis
    sel_ref: (G*W, G*kh*OW)   -- static block-diagonal one-hot selector
    o_ref:   (TR, G*kh*OW)    -- row-major view of the final (N, C, OH, OW)
    """
    x = x_ref[...].astype(sel_ref.dtype)
    # One-hot weights => exact in the work dtype; no f32 intermediate for bf16.
    o_ref[...] = jnp.dot(
        x, sel_ref[...], preferred_element_type=sel_ref.dtype
    ).astype(o_ref.dtype)


def _resize_planes_kernel(rsel_ref, csel_ref, x_ref, o_ref):
    """General path (non-integer row scale / downscale).

    x_ref: (TB, H, W), rsel_ref: (OH, H), csel_ref: (W, OW), o_ref: (TB, OH, OW).
    Column select is one flat lane-dense 2-D matmul; row select a single
    one-hot contraction (selectors stay 2-D, never broadcast-materialized).
    """
    x = x_ref[...].astype(csel_ref.dtype)
    tb, h, w = x.shape
    ow = csel_ref.shape[1]
    cols = jnp.dot(
        x.reshape(tb * h, w), csel_ref[...],
        preferred_element_type=csel_ref.dtype,
    )                                                   # (TB*H, OW)
    out = jnp.einsum(
        "oh,bhc->boc", rsel_ref[...], cols.reshape(tb, h, ow),
        preferred_element_type=rsel_ref.dtype,
    )                                                   # (TB, OH, OW)
    o_ref[...] = out.astype(o_ref.dtype)


# ---------------------------------------------------------------------------
# Wrapper
# ---------------------------------------------------------------------------

def resize_nearest(features: jax.Array, target_size) -> jax.Array:
    """TPU Pallas equivalent of F.interpolate(features, target_size) (mode='nearest')."""
    N, C, H, W = features.shape
    OH, OW = int(target_size[0]), int(target_size[1])
    B = N * C
    out_dtype = features.dtype

    if (OH, OW) == (H, W):
        return features

    # Keep f32/bf16 in their own dtype; everything else computes in f32.
    if features.dtype == jnp.float32 or features.dtype == jnp.bfloat16:
        work_dtype = features.dtype
    else:
        work_dtype = jnp.float32
    itemsize = int(np.dtype(work_dtype).itemsize)
    sublane = max(8, 32 // itemsize)        # 8 for f32, 16 for bf16

    vmem_limit, block_budget = _vmem_budgets()

    # Static nearest-neighbor column selector (W, OW).
    col_src = _nearest_src_indices(OW, W)
    csel_np = np.zeros((W, OW), dtype=np.float32)
    csel_np[col_src, np.arange(OW)] = 1.0

    use_fast = False
    if OH % H == 0:
        kh = OH // H
        wide = kh * OW                      # output columns per input row
        if W * wide * itemsize <= _SEL_BUDGET_BYTES:
            use_fast = True

    if use_fast:
        # ---- Fast path: integer row scale -> single lane-dense 2-D matmul ----
        csel_wide = np.tile(csel_np, (1, kh))            # (W, kh*OW)

        # Fold G consecutive input rows into the lane axis with a block-diagonal
        # selector kron(I_G, csel_wide).  K = G*W is capped at 64 for f32 (keeps
        # the one-hot matmul HBM-bound even on v5e's slow f32 MXU) and 128 for
        # bf16 (lane-dense loads).
        total_rows = B * H
        k_cap = 128 if work_dtype == jnp.bfloat16 else 64
        G = 1
        for g in _divisors(total_rows):
            if g * W > k_cap:
                continue
            if g * wide > 4096:
                continue
            if (g * W) * (g * wide) * itemsize > _SEL_BUDGET_BYTES:
                continue
            G = max(G, g)

        sel_np = np.kron(np.eye(G, dtype=np.float32), csel_wide)
        sel = jnp.asarray(sel_np, dtype=work_dtype)      # (G*W, G*kh*OW)

        rows_g = total_rows // G
        in_cols = G * W
        out_cols = G * wide

        # VMEM budget: selector single-buffered, x/out double-buffered.
        sel_bytes = in_cols * out_cols * itemsize
        stream_bytes_per_row = 2 * (in_cols + out_cols) * itemsize
        row_cap = max(sublane, (block_budget - sel_bytes) // stream_bytes_per_row)
        TR = _pick_tile(rows_g, row_cap, sublane, min_steps=4)
        grid = (pl.cdiv(rows_g, TR),)

        x2 = features.reshape(rows_g, in_cols)

        cost = pl.CostEstimate(
            flops=int(2 * rows_g * in_cols * out_cols),
            transcendentals=0,
            bytes_accessed=int(
                rows_g * in_cols * np.dtype(features.dtype).itemsize
                + rows_g * out_cols * np.dtype(out_dtype).itemsize
                + sel_bytes
            ),
        )

        out2 = pl.pallas_call(
            _resize_rows_kernel,
            out_shape=jax.ShapeDtypeStruct((rows_g, out_cols), out_dtype),
            grid_spec=pltpu.PrefetchScalarGridSpec(
                num_scalar_prefetch=0,
                grid=grid,
                in_specs=[
                    # Constant selector: single-buffered, resident across steps.
                    pl.BlockSpec((in_cols, out_cols), lambda i: (0, 0),
                                 pipeline_mode=pl.Buffered(1)),
                    pl.BlockSpec((TR, in_cols), lambda i: (i, 0)),
                ],
                out_specs=pl.BlockSpec((TR, out_cols), lambda i: (i, 0)),
            ),
            compiler_params=pltpu.CompilerParams(
                dimension_semantics=("parallel",),
                vmem_limit_bytes=vmem_limit,
            ),
            cost_estimate=cost,
        )(sel, x2)

        return out2.reshape(N, C, OH, OW)

    # ---- General path: arbitrary (non-integer / downscale) row mapping ----
    # Note: on downscale this still reads all H input rows; a scalar-prefetch
    # row-gather (pl.Element index_map) would cut HBM reads by H/OH but is
    # left out to keep this fallback simple and robust.
    row_src = _nearest_src_indices(OH, H)
    rsel_np = np.zeros((OH, H), dtype=np.float32)
    rsel_np[np.arange(OH), row_src] = 1.0
    rsel = jnp.asarray(rsel_np, dtype=work_dtype)
    csel = jnp.asarray(csel_np, dtype=work_dtype)

    x3 = features.reshape(B, H, W)

    sel_bytes = (OH * H + W * OW) * itemsize             # single-buffered
    plane_bytes = 2 * (H * W + OH * OW) * itemsize + (H * OW + OH * W) * itemsize
    plane_cap = max(1, (block_budget - sel_bytes) // max(1, plane_bytes))
    TB = _pick_tile(B, plane_cap, 1, min_steps=4)
    grid = (pl.cdiv(B, TB),)

    cost = pl.CostEstimate(
        flops=int(2 * B * H * OW * (W + OH)),
        transcendentals=0,
        bytes_accessed=int(
            B * H * W * np.dtype(features.dtype).itemsize
            + B * OH * OW * np.dtype(out_dtype).itemsize
            + sel_bytes
        ),
    )

    out3 = pl.pallas_call(
        _resize_planes_kernel,
        out_shape=jax.ShapeDtypeStruct((B, OH, OW), out_dtype),
        grid_spec=pltpu.PrefetchScalarGridSpec(
            num_scalar_prefetch=0,
            grid=grid,
            in_specs=[
                pl.BlockSpec((OH, H), lambda b: (0, 0),
                             pipeline_mode=pl.Buffered(1)),   # row selector
                pl.BlockSpec((W, OW), lambda b: (0, 0),
                             pipeline_mode=pl.Buffered(1)),   # col selector
                pl.BlockSpec((TB, H, W), lambda b: (b, 0, 0)),
            ],
            out_specs=pl.BlockSpec((TB, OH, OW), lambda b: (b, 0, 0)),
        ),
        compiler_params=pltpu.CompilerParams(
            dimension_semantics=("parallel",),
            vmem_limit_bytes=vmem_limit,
        ),
        cost_estimate=cost,
    )(rsel, csel, x3)

    return out3.reshape(N, C, OH, OW)


def _numpy_nearest_ref(x_np: np.ndarray, target_size) -> np.ndarray:
    rs = _nearest_src_indices(target_size[0], x_np.shape[2])
    cs = _nearest_src_indices(target_size[1], x_np.shape[3])
    return x_np[:, :, rs][:, :, :, cs]


if __name__ == "__main__":
    key = jax.random.PRNGKey(0)
    x = jax.random.normal(key, (2, 4, 16, 16), dtype=jnp.float32)
    x_np = np.asarray(x)

    # Module equivalent: Resize(32, 32) -> fast (integer row-scale) path.
    target_fast = (32, 32)
    out_fast = jax.block_until_ready(resize_nearest(x, target_fast))
    assert out_fast.shape == (2, 4, 32, 32), out_fast.shape
    np.testing.assert_allclose(
        np.asarray(out_fast), _numpy_nearest_ref(x_np, target_fast), rtol=0, atol=0)

    # Exercise the general (non-integer row scale) path too: Resize(24, 20).
    target_gen = (24, 20)
    out_gen = jax.block_until_ready(resize_nearest(x, target_gen))
    assert out_gen.shape == (2, 4, 24, 20), out_gen.shape
    np.testing.assert_allclose(
        np.asarray(out_gen), _numpy_nearest_ref(x_np, target_gen), rtol=0, atol=0)

    print("KERNEL_OK")
</pallas_src>

<mosaic_0001>
module attributes {stable_mosaic.version = 11 : i64} {
  func.func @_resize_rows_kernel(%arg0: i32, %arg1: memref<64x256xf32, #tpu.memory_space<vmem>>, %arg2: memref<8x64xf32, #tpu.memory_space<vmem>>, %arg3: memref<8x256xf32, #tpu.memory_space<vmem>>) attributes {dimension_semantics = [#tpu.dimension_semantics<parallel>], iteration_bounds = array<i64: 4>, scalar_prefetch = 0 : i64, scratch_operands = 0 : i64, tpu.core_type = #tpu.core_type<tc>, window_params = [{pipeline_mode = #tpu.pipeline_mode<synchronous>, transform_indices = @transform_0, window_bounds = array<i64: 64, 256>}, {transform_indices = @transform_1, window_bounds = array<i64: 8, 64>}, {transform_indices = @transform_2, window_bounds = array<i64: 8, 256>}]} {
    %c0 = arith.constant 0 : index
    %c0_0 = arith.constant 0 : index
    %0 = vector.load %arg2[%c0, %c0_0] : memref<8x64xf32, #tpu.memory_space<vmem>>, vector<8x64xf32>
    %c0_1 = arith.constant 0 : index
    %c0_2 = arith.constant 0 : index
    %1 = vector.load %arg1[%c0_1, %c0_2] : memref<64x256xf32, #tpu.memory_space<vmem>>, vector<64x256xf32>
    %cst = arith.constant dense<0.000000e+00> : vector<8x256xf32>
    %2 = tpu.matmul %0, %1, %cst {dimension_numbers = #tpu.dot_dimension_numbers<[1], [0], [0], [1], [0, 0, 1, 1], [], []>} : vector<8x64xf32>, vector<64x256xf32>, vector<8x256xf32> -> vector<8x256xf32>
    %c0_3 = arith.constant 0 : index
    %c0_4 = arith.constant 0 : index
    %3 = vector.load %arg3[%c0_3, %c0_4] : memref<8x256xf32, #tpu.memory_space<vmem>>, vector<8x256xf32>
    tpu.vector_store %arg3[%c0_3, %c0_4], %2 {strides = array<i32>} : memref<8x256xf32, #tpu.memory_space<vmem>>, vector<8x256xf32>,
    return
  }
  func.func @transform_0(%arg0: i32) -> (i32, i32) {
    %c0_i32 = arith.constant 0 : i32
    %c0_i32_0 = arith.constant 0 : i32
    %c0_i32_1 = arith.constant 0 : i32
    return %c0_i32, %c0_i32_0 : i32, i32
  }
  func.func @transform_1(%arg0: i32) -> (i32, i32) {
    %c0_i32 = arith.constant 0 : i32
    %c0_i32_0 = arith.constant 0 : i32
    return %arg0, %c0_i32 : i32, i32
  }
  func.func @transform_2(%arg0: i32) -> (i32, i32) {
    %c0_i32 = arith.constant 0 : i32
    %c0_i32_0 = arith.constant 0 : i32
    return %arg0, %c0_i32 : i32, i32
  }
}

</mosaic_0001>

<llo_original>
// kernel: tpu_custom_call.1
$region0: #{tpu_custom_call.1}
  #allocation0 [shape = 'u32[]', space=smem, size = 0x4, offset = 0x4, fixed_abs, tag = 'smem constant byte address 0x4 - core index']
  #allocation1 [shape = 'u32[144,128]{1,0:T(1,128)}', space=vmem, size = 0x12000, scoped, tag = 'internal scratch']
  %s0 = inlined_call_operand.hbm [shape: f32[64,256], index: 0, kind: input, shape index: {}]
  %s1 = inlined_call_operand.hbm [shape: f32[32,64], index: 1, kind: input, shape index: {}]
  %s2 = inlined_call_operand.hbm [shape: f32[32,256], index: 2, kind: output, shape index: {}]
  %s3 = sld [smem:[#allocation0]]
  $region49: #{tpu_custom_call.1} parent=0
    _
  %s5 = ssub.s32 1, %s3
  %s6 = scalar_select 0, %s5, %s3
  $region1: #{tpu_custom_call.1} parent=0
    #allocation2 [shape = 'u8[65536]{0}', space=vmem, size = 0x10000, scoped, tag = 'input window, operand 0, single buffered']
    #allocation3 [shape = 's32[2]{0}', space=sflag, size = 0x8, scoped, tag = 'scoped memory for tpu_custom_call.1']
    #allocation4 [shape = 's32[2]{0}', space=sflag, size = 0x8, scoped, tag = 'scoped memory for tpu_custom_call.1']
    #allocation5 [shape = 'u8[8192]{0}', space=vmem, size = 0x2000, scoped, tag = 'input window, operand 1']
    #allocation6 [shape = 's32[2]{0}', space=sflag, size = 0x8, scoped, tag = 'scoped memory for tpu_custom_call.1']
    #allocation7 [shape = 'u8[16384]{0}', space=vmem, size = 0x4000, scoped, tag = 'output window, operand 0']
    %7 = vsyncpa [#allocation3], 0
    %8 = vsyncpa [#allocation6], 0
    %s9 = scalar_lea.sflag [#allocation6], 1
    %10 = vsyncpa %s9, 0
    %11 = vsyncpa [#allocation4], 0
    %s12 = scalar_lea.sflag [#allocation4], 1
    %13 = vsyncpa %s12, 0
    loop: start=0, step=1, limit=6
    $region2: #{tpu_custom_call.1} parent=1 // loop_pre_header
      _
    $region3: #{tpu_custom_call.1} parent=1 // loop_header
      %s15 = sphi 0, %s19
      %p16 = scmp.ge.s32.totalorder %s15, 6
      %s23 = sphi 0, %s23
      %s25 = sphi 0, %s23
      %s26 = sphi 0, %s25
      %s40 = sphi 0, %s26
      %s46 = sphi 0, %s48
      %s49 = sphi 0, %s46
      %s50 = sphi 0, %s49
      %s66 = sphi 0, %s50
      %s72 = sphi 0, %s74
      %s75 = sphi 0, %s72
      %s76 = sphi 0, %s75
      %s92 = sphi 0, %s76
    $region4: #{tpu_custom_call.1} parent=1 // loop_header_branch
      %18 = sbr.rel (%p16) target = $region8
    $region5: #{tpu_custom_call.1} parent=1 // loop_body
      %s20 = ssub.s32 %s15, 1
      %s21 = ssub.s32 %s15, 2
      %s22 = sadd.s32 %s15, 1
      %s24 = sadd.s32 %s23, 1
      %p27 = scmp.eq.s32.totalorder %s15, 3
      %p28 = scmp.ne.s32.totalorder %s23, %s25
      %p29 = scmp.eq.s32.totalorder %s15, 0
      %p30 = por %p28, %p29
      %p31 = scmp.ne.s32.totalorder %s23, %s25
      %p32 = scmp.eq.s32.totalorder %s20, 3
      %p33 = por %p31, %p32
      %p34 = scmp.ne.s32.totalorder %s25, %s26
      %p35 = scmp.eq.s32.totalorder %s20, 0
      %p36 = por %p34, %p35
      %p37 = scmp.ne.s32.totalorder %s25, %s26
      %p38 = scmp.eq.s32.totalorder %s21, 3
      %p39 = por %p37, %p38
      %p41 = scmp.ne.s32.totalorder %s26, %s40
      %p42 = scmp.eq.s32.totalorder %s21, 0
      %p43 = por %p41, %p42
      %s44 = ssub.s32 %s15, %s22
      %p45 = scmp.eq.s32.totalorder %s44, 0
      %s47 = sadd.s32 %s46, 1
      %s48 = scalar_select %p45, %s46, %s47
      %p51 = pneg %p45
      %p52 = scmp.eq.s32.totalorder %s15, 3
      %p53 = por %p51, %p52
      %p54 = scmp.ne.s32.totalorder %s46, %s49
      %p55 = scmp.eq.s32.totalorder %s15, 0
      %p56 = por %p54, %p55
      %p57 = scmp.ne.s32.totalorder %s46, %s49
      %p58 = scmp.eq.s32.totalorder %s20, 3
      %p59 = por %p57, %p58
      %p60 = scmp.ne.s32.totalorder %s49, %s50
      %p61 = scmp.eq.s32.totalorder %s20, 0
      %p62 = por %p60, %p61
      %p63 = scmp.ne.s32.totalorder %s49, %s50
      %p64 = scmp.eq.s32.totalorder %s21, 3
      %p65 = por %p63, %p64
      %p67 = scmp.ne.s32.totalorder %s50, %s66
      %p68 = scmp.eq.s32.totalorder %s21, 0
      %p69 = por %p67, %p68
      %s70 = ssub.s32 %s15, %s22
      %p71 = scmp.eq.s32.totalorder %s70, 0
      %s73 = sadd.s32 %s72, 1
      %s74 = scalar_select %p71, %s72, %s73
      %p77 = pneg %p71
      %p78 = scmp.eq.s32.totalorder %s15, 3
      %p79 = por %p77, %p78
      %p80 = scmp.ne.s32.totalorder %s72, %s75
      %p81 = scmp.eq.s32.totalorder %s15, 0
      %p82 = por %p80, %p81
      %p83 = scmp.ne.s32.totalorder %s72, %s75
      %p84 = scmp.eq.s32.totalorder %s20, 3
      %p85 = por %p83, %p84
      %p86 = scmp.ne.s32.totalorder %s75, %s76
      %p87 = scmp.eq.s32.totalorder %s20, 0
      %p88 = por %p86, %p87
      %p89 = scmp.ne.s32.totalorder %s75, %s76
      %p90 = scmp.eq.s32.totalorder %s21, 3
      %p91 = por %p89, %p90
      %p93 = scmp.ne.s32.totalorder %s76, %s92
      %p94 = scmp.eq.s32.totalorder %s21, 0
      %p95 = por %p93, %p94
      %p96 = scmp.le.s32.totalorder 1, %s15
      %p97 = scmp.lt.s32.totalorder %s15, 5
      %p98 = pnand %p96, %p97
      %p99 = pneg %p98
      // Predicated region
      $region9: #{tpu_custom_call.1} parent=5 // pred_check
        _
      $region10: #{tpu_custom_call.1} parent=5 // pred_check_branch
        %101 = sbr.rel (%p98) target = $region12
      $region11: #{tpu_custom_call.1} parent=5 // pred_region
        %s102 = ssub.s32 %s15, 1
        // Predicated region
        $region13: #{tpu_custom_call.1} parent=11 // pred_check
          %p103 = pneg %p36
        $region14: #{tpu_custom_call.1} parent=11 // pred_check_branch
          %105 = sbr.rel (%p103) target = $region16
        $region15: #{tpu_custom_call.1} parent=11 // pred_region
          %s107 = ssub.s32 2048, 2048
          %108 = vsyncadd [#allocation3], %s107
          %s109 = sshll.u32 [#allocation2], 4
          %s110 = int_to_ptr.vmem [resolvable:$true] %s109
          %115 = dma.hbm_to_vmem [thread:$0]  %s0, 2048, %s110, [#allocation3], 256, 256, 16
        $region16: #{tpu_custom_call.1} parent=11 // pred_fallthru
          _
      $region12: #{tpu_custom_call.1} parent=5 // pred_fallthru
        _
      %p116 = scmp.lt.s32.totalorder %s15, 4
      // Predicated region
      $region17: #{tpu_custom_call.1} parent=5 // pred_check
        %p117 = pneg %p116
      $region18: #{tpu_custom_call.1} parent=5 // pred_check_branch
        %119 = sbr.rel (%p117) target = $region20
      $region19: #{tpu_custom_call.1} parent=5 // pred_region
        // Predicated region
        $region21: #{tpu_custom_call.1} parent=19 // pred_check
          %p120 = pneg %p56
        $region22: #{tpu_custom_call.1} parent=19 // pred_check_branch
          %122 = sbr.rel (%p120) target = $region24
        $region23: #{tpu_custom_call.1} parent=19 // pred_region
          %s123 = sand.u32 %s46, 1
          %s124 = scalar_lea.sflag [#allocation6], %s123
          %s125 = sand.u32 %s46, 1
          %s126 = smul.addr %s125, 8
          %s127 = scalar_lea.vmem [#allocation5], %s126
          %s129 = ssub.s32 128, 128
          %130 = vsyncadd %s124, %s129
          %s131 = smul.addr %s15, 128
          %s132 = scalar_lea.hbm %s1, %s131
          %s134 = sshll.u32 %s127, 4
          %s135 = int_to_ptr.vmem [resolvable:$true] %s134
          %137 = dma.hbm_to_vmem [thread:$0]  %s132, 128, %s135, %s124
        $region24: #{tpu_custom_call.1} parent=19 // pred_fallthru
          _
      $region20: #{tpu_custom_call.1} parent=5 // pred_fallthru
        _
      %p138 = scmp.le.s32.totalorder 1, %s15
      %p139 = scmp.lt.s32.totalorder %s15, 5
      %p140 = pnand %p138, %p139
      %p141 = pneg %p140
      // Predicated region
      $region25: #{tpu_custom_call.1} parent=5 // pred_check
        _
      $region26: #{tpu_custom_call.1} parent=5 // pred_check_branch
        %143 = sbr.rel (%p140) target = $region28
      $region27: #{tpu_custom_call.1} parent=5 // pred_region
        %s144 = ssub.s32 %s15, 1
        // Predicated region
        $region29: #{tpu_custom_call.1} parent=27 // pred_check
          %p145 = pneg %p36
        $region30: #{tpu_custom_call.1} parent=27 // pred_check_branch
          %147 = sbr.rel (%p145) target = $region32
        $region31: #{tpu_custom_call.1} parent=27 // pred_region
          %148 = dma.done [#allocation3], 2048
        $region32: #{tpu_custom_call.1} parent=27 // pred_fallthru
          _
        %s149 = sand.u32 %s49, 1
        %s150 = scalar_lea.sflag [#allocation6], %s149
        %s151 = sand.u32 %s49, 1
        %s152 = smul.addr %s151, 8
        %s153 = scalar_lea.vmem [#allocation5], %s152
        // Predicated region
        $region33: #{tpu_custom_call.1} parent=27 // pred_check
          %p154 = pneg %p62
        $region34: #{tpu_custom_call.1} parent=27 // pred_check_branch
          %156 = sbr.rel (%p154) target = $region36
        $region35: #{tpu_custom_call.1} parent=27 // pred_region
          %157 = dma.done %s150, 128
        $region36: #{tpu_custom_call.1} parent=27 // pred_fallthru
          _
        %p158 = pneg %p36
        %p159 = pneg %p33
        %s160 = sand.u32 %s49, 1
        %s161 = scalar_lea.sflag [#allocation6], %s160
        %s162 = sand.u32 %s49, 1
        %s163 = smul.addr %s162, 8
        %s164 = scalar_lea.vmem [#allocation5], %s163
        %p165 = pneg %p62
        %p166 = pneg %p59
        %p167 = pneg %p88
        %p168 = pneg %p85
        %s169 = sand.u32 %s75, 1
        %s170 = scalar_lea.sflag [#allocation4], %s169
        %s171 = sand.u32 %s75, 1
        %s172 = smul.addr %s171, 16
        %s173 = scalar_lea.vmem [#allocation7], %s172
        %v174 = vld [vmem:[%s153] sm:$0xff]
        %v175 = vld [vmem:[#allocation2] sm:$0xff]
        %v176 = vld [vmem:[#allocation2 + $0x8] sm:$0xff]
        %v177 = vld [vmem:[#allocation2 + $0x10] sm:$0xff]
        %v178 = vld [vmem:[#allocation2 + $0x18] sm:$0xff]
        %v179 = vld [vmem:[#allocation2 + $0x20] sm:$0xff]
        %v180 = vld [vmem:[#allocation2 + $0x28] sm:$0xff]
        %v181 = vld [vmem:[#allocation2 + $0x30] sm:$0xff]
        %v182 = vld [vmem:[#allocation2 + $0x38] sm:$0xff]
        %v183 = vld [vmem:[#allocation2 + $0x40] sm:$0xff]
        %v184 = vld [vmem:[#allocation2 + $0x48] sm:$0xff]
        %v185 = vld [vmem:[#allocation2 + $0x50] sm:$0xff]
        %v186 = vld [vmem:[#allocation2 + $0x58] sm:$0xff]
        %v187 = vld [vmem:[#allocation2 + $0x60] sm:$0xff]
        %v188 = vld [vmem:[#allocation2 + $0x68] sm:$0xff]
        %v189 = vld [vmem:[#allocation2 + $0x70] sm:$0xff]
        %v190 = vld [vmem:[#allocation2 + $0x78] sm:$0xff]
        %vm191 = vcmask 523264
        %v193 = vsel %vm191, %v174, 0
        %195 = vmatprep.subr.mxu0 %v176
        %196 = vmatpush1.msra.mxu0 %v175
        %197 = vmatprep.subr.mxu0 %v178
        %198 = vmatpush1.msra.mxu0 %v177
        %199 = vmatprep.subr.mxu0 %v180
        %200 = vmatpush1.msra.mxu0 %v179
        %201 = vmatprep.subr.mxu0 %v182
        %202 = vmatpush1.msra.mxu0 %v181
        %203 = vmatprep.subr.mxu0 %v184
        %204 = vmatpush1.msra.mxu0 %v183
        %205 = vmatprep.subr.mxu0 %v186
        %206 = vmatpush1.msra.mxu0 %v185
        %207 = vmatprep.subr.mxu0 %v188
        %208 = vmatpush1.msra.mxu0 %v187
        %209 = vmatprep.subr.mxu0 %v190
        %210 = vmatpush1.msra.mxu0 %v189
        %211 = vmatprep.subr.mxu0 0.0
        %212 = vmatpush1.msra.mxu0 0.0
        %213 = vmatprep.subr.mxu0 0.0
        %214 = vmatpush1.msra.mxu0 0.0
        %215 = vmatprep.subr.mxu0 0.0
        %216 = vmatpush1.msra.mxu0 0.0
        %217 = vmatprep.subr.mxu0 0.0
        %218 = vmatpush1.msra.mxu0 0.0
        %219 = vmatprep.subr.mxu0 0.0
        %220 = vmatpush1.msra.mxu0 0.0
        %221 = vmatprep.subr.mxu0 0.0
        %222 = vmatpush1.msra.mxu0 0.0
        %223 = vmatprep.subr.mxu0 0.0
        %224 = vmatpush1.msra.mxu0 0.0
        %225 = vmatprep.subr.mxu0 0.0
        %226 = vmatpush1.msra.mxu0 0.0
        %227 = vmatprep.subr.mxu0 0.0
        %228 = vmatpush1.msra.mxu0 0.0
        %229 = vmatprep.subr.mxu0 0.0
        %230 = vmatpush1.msra.mxu0 0.0
        %231 = vmatprep.subr.mxu0 0.0
        %232 = vmatpush1.msra.mxu0 0.0
        %233 = vmatprep.subr.mxu0 0.0
        %234 = vmatpush1.msra.mxu0 0.0
        %235 = vmatprep.subr.mxu0 0.0
        %236 = vmatpush1.msra.mxu0 0.0
        %237 = vmatprep.subr.mxu0 0.0
        %238 = vmatpush1.msra.mxu0 0.0
        %239 = vmatprep.subr.mxu0 0.0
        %240 = vmatpush1.msra.mxu0 0.0
        %241 = vmatprep.subr.mxu0 0.0
        %242 = vmatpush1.msra.mxu0 0.0
        %243 = vmatprep.subr.mxu0 0.0
        %244 = vmatpush1.msra.mxu0 0.0
        %245 = vmatprep.subr.mxu0 0.0
        %246 = vmatpush1.msra.mxu0 0.0
        %247 = vmatprep.subr.mxu0 0.0
        %248 = vmatpush1.msra.mxu0 0.0
        %249 = vmatprep.subr.mxu0 0.0
        %250 = vmatpush1.msra.mxu0 0.0
        %251 = vmatprep.subr.mxu0 0.0
        %252 = vmatpush1.msra.mxu0 0.0
        %253 = vmatprep.subr.mxu0 0.0
        %254 = vmatpush1.msra.mxu0 0.0
        %255 = vmatprep.subr.mxu0 0.0
        %256 = vmatpush1.msra.mxu0 0.0
        %257 = vmatprep.subr.mxu0 0.0
        %258 = vmatpush1.msra.mxu0 0.0
        %259 = vmatprep.mubr.f32.mxu0 0.0
        %260 = vmatmul.mubr.f32.gmra.mrb[0].mxu0 %v193
        %v261 = vpop.f32.mrb[0].mxu0
        %v262 = vadd.f32 0.0, %v261
        %v263 = vpop.f32.mrb[0].mxu0
        %v264 = vadd.f32 0.0, %v263
        %265 = vdwg.mxu0
        %266 = vst [vmem:[%s173] sm:$0xff] %v262
        %267 = vst [vmem:[%s173 + $0x8] sm:$0xff] %v264
        %s268 = sand.u32 %s75, 1
        %s269 = scalar_lea.sflag [#allocation4], %s268
        %s270 = sand.u32 %s75, 1
        %s271 = smul.addr %s270, 16
        %s272 = scalar_lea.vmem [#allocation7], %s271
        // Predicated region
        $region37: #{tpu_custom_call.1} parent=27 // pred_check
          %p273 = pneg %p85
        $region38: #{tpu_custom_call.1} parent=27 // pred_check_branch
          %275 = sbr.rel (%p273) target = $region40
        $region39: #{tpu_custom_call.1} parent=27 // pred_region
          %s277 = ssub.s32 256, 256
          %278 = vsyncadd %s269, %s277
          %s279 = smul.addr %s20, 2
          %s280 = smul.addr %s279, 128
          %s281 = scalar_lea.hbm %s2, %s280
          %s283 = sshll.u32 %s272, 4
          %s284 = int_to_ptr.vmem [resolvable:$true] %s283
          %286 = dma.vmem_to_hbm [thread:$0]  %s284, 256, %s281, %s269
        $region40: #{tpu_custom_call.1} parent=27 // pred_fallthru
          _
      $region28: #{tpu_custom_call.1} parent=5 // pred_fallthru
        _
      %p287 = scmp.le.s32.totalorder 2, %s15
      // Predicated region
      $region41: #{tpu_custom_call.1} parent=5 // pred_check
        %p288 = pneg %p287
      $region42: #{tpu_custom_call.1} parent=5 // pred_check_branch
        %290 = sbr.rel (%p288) target = $region44
      $region43: #{tpu_custom_call.1} parent=5 // pred_region
        %s291 = ssub.s32 %s15, 2
        // Predicated region
        $region45: #{tpu_custom_call.1} parent=43 // pred_check
          %p292 = pneg %p91
        $region46: #{tpu_custom_call.1} parent=43 // pred_check_branch
          %294 = sbr.rel (%p292) target = $region48
        $region47: #{tpu_custom_call.1} parent=43 // pred_region
          %s295 = sand.u32 %s76, 1
          %s296 = scalar_lea.sflag [#allocation4], %s295
          %s297 = sand.u32 %s76, 1
          %s298 = smul.addr %s297, 16
          %s299 = scalar_lea.vmem [#allocation7], %s298
          %300 = dma.done %s296, 256
        $region48: #{tpu_custom_call.1} parent=43 // pred_fallthru
          _
      $region44: #{tpu_custom_call.1} parent=5 // pred_fallthru
        _
    $region6: #{tpu_custom_call.1} parent=1 // loop_footer
      %s19 = sadd.s32 1, %s15
    $region7: #{tpu_custom_call.1} parent=1 // loop_footer_branch
      %14 = sbr.rel target = $region3
    $region8: #{tpu_custom_call.1} parent=1 // loop_exit
      _
    %301 = vsyncpa [#allocation3], 1
    %s302 = scalar_lea.sflag [#allocation3], 1
    %303 = vsyncpa %s302, 1
    %304 = vsyncpa [#allocation6], 1
    %s305 = scalar_lea.sflag [#allocation6], 1
    %306 = vsyncpa %s305, 1
    %307 = vsyncpa [#allocation4], 1
    %s308 = scalar_lea.sflag [#allocation4], 1
    %309 = vsyncpa %s308, 1

</llo_original>
